<compile_context>
chip_gen: v7x
topology: tpu7x:2x2x1
jax: 0.10.0
libtpu: 0.0.40
codegen_flags: <defaults>
</compile_context>

<pallas_src>
import math

import jax
import jax.numpy as jnp
from jax.experimental import pallas as pl
from jax.experimental.pallas import tpu as pltpu


_VMEM_LIMIT_BYTES = 48 * 1024 * 1024     # explicit scoped-VMEM cap: lifts v5e's 16 MiB
                                         # default, stays under v7x's 64 MiB physical
_LINEAR_TILE_BUDGET = 40 * 1024 * 1024   # double-buffered working-set budget for linears


def _pick_tile(dim, candidates):
    """Largest candidate that evenly divides `dim`; otherwise the full dim."""
    for c in candidates:
        if dim % c == 0:
            return c
    return dim


def _head_major(x):
    """(A, H, D) -> (H, A, D) relayout inside the kernel (lane dim unchanged)."""
    if hasattr(pltpu, "einshape"):
        return pltpu.einshape("ahd->had", x)
    return jnp.swapaxes(x, 0, 1)   # fallback for older jax


def _seq_major(x):
    """(H, A, D) -> (A, H, D)."""
    if hasattr(pltpu, "einshape"):
        return pltpu.einshape("had->ahd", x)
    return jnp.swapaxes(x, 0, 1)


# ----------------------------------------------------------------------------
# Kernel 1: fused linear  y = x @ W + b, tiled over (M, N, K) on the MXU.
# ----------------------------------------------------------------------------
def _linear_kernel(x_ref, w_ref, b_ref, o_ref, acc_ref):
    @pl.when(pl.program_id(2) == 0)
    def _init():
        acc_ref[...] = jnp.zeros(acc_ref.shape, jnp.float32)

    acc_ref[...] += jnp.dot(x_ref[...], w_ref[...],
                            preferred_element_type=jnp.float32)

    @pl.when(pl.program_id(2) == pl.num_programs(2) - 1)
    def _finalize():
        o_ref[...] = (acc_ref[...] + b_ref[...].astype(jnp.float32)
                      ).astype(o_ref.dtype)


def _linear_tiles(M, N, K, itemsize):
    """Prefer big M tiles and an untiled N (redundant streaming ~ 1/tm + 1/tn);
    shrink K first, then N, then M, to stay inside the VMEM budget."""
    def vmem_bytes(tm, tn, tk):
        return (2 * (tm * tk + tk * tn + tn) * itemsize   # double-buffered x, w, bias
                + 2 * tm * tn * itemsize                  # double-buffered output
                + tm * tn * 4)                            # f32 accumulator scratch

    tm_cands = [t for t in (1024, 512, 256, 128) if M % t == 0] or [M]
    tn_cands = [N] + [t for t in (1024, 512, 256, 128) if N % t == 0]
    tk_cands = [t for t in (512, 256, 128) if K % t == 0] or [K]
    for tm in tm_cands:
        for tn in tn_cands:
            for tk in tk_cands:
                if vmem_bytes(tm, tn, tk) <= _LINEAR_TILE_BUDGET:
                    return tm, tn, tk
    return tm_cands[-1], tn_cands[-1], tk_cands[-1]


def linear(x2d, w, b):
    M, K = x2d.shape
    N = w.shape[1]
    tm, tn, tk = _linear_tiles(M, N, K, x2d.dtype.itemsize)
    grid = (M // tm, N // tn, K // tk)

    return pl.pallas_call(
        _linear_kernel,
        out_shape=jax.ShapeDtypeStruct((M, N), x2d.dtype),
        grid_spec=pltpu.PrefetchScalarGridSpec(
            num_scalar_prefetch=0,
            grid=grid,
            in_specs=[
                pl.BlockSpec((tm, tk), lambda i, j, k: (i, k)),
                pl.BlockSpec((tk, tn), lambda i, j, k: (k, j)),
                pl.BlockSpec((1, tn), lambda i, j, k: (0, j)),
            ],
            out_specs=pl.BlockSpec((tm, tn), lambda i, j, k: (i, j)),
            scratch_shapes=[pltpu.VMEM((tm, tn), jnp.float32)],
        ),
        compiler_params=pltpu.CompilerParams(
            dimension_semantics=("parallel", "parallel", "arbitrary"),
            vmem_limit_bytes=_VMEM_LIMIT_BYTES),
        cost_estimate=pl.CostEstimate(
            flops=2 * M * N * K,
            transcendentals=0,
            bytes_accessed=x2d.dtype.itemsize * (M * K + K * N + M * N + N)),
    )(x2d, w, b.reshape(1, N))


# ----------------------------------------------------------------------------
# Kernel 2: causal flash attention straight out of the (B, T, 3, H, D) qkv
# activation; grid=(B, q_tiles, kv_tiles) with kv last ("arbitrary"); online
# softmax state (m, l, acc) in f32 VMEM scratch; output stored in (B, T, H, D).
# ----------------------------------------------------------------------------
_MASK = -1e30  # finite "minus infinity": keeps exp()/max() NaN-free


def _flash_attn_kernel(q_ref, k_ref, v_ref, o_ref, q_sc, m_sc, l_sc, acc_sc):
    # q_ref: (tq, H, D)  k_ref/v_ref: (tk, H, D)  o_ref: (tq, H, D)
    # q_sc: (H, tq, D) input dtype; m_sc/l_sc: (H, tq, 1) f32; acc_sc: (H, tq, D) f32
    qi = pl.program_id(1)
    ki = pl.program_id(2)
    tq, _, D = q_ref.shape
    tk = k_ref.shape[0]
    # exp() in bf16 when inputs are bf16 (EUP-bound inner loop on v6e/v7x).
    p_dtype = jnp.bfloat16 if v_ref.dtype == jnp.bfloat16 else jnp.float32

    @pl.when(ki == 0)
    def _init():
        # Head-major copy of the q tile, once per q tile, with the 1/sqrt(D)
        # scale folded in (tq*H*D multiplies instead of H*tq*tk every step).
        scale = 1.0 / math.sqrt(D)
        q_sc[...] = (_head_major(q_ref[...]) * scale).astype(q_sc.dtype)
        m_sc[...] = jnp.full(m_sc.shape, _MASK, jnp.float32)
        l_sc[...] = jnp.zeros(l_sc.shape, jnp.float32)
        acc_sc[...] = jnp.zeros(acc_sc.shape, jnp.float32)

    def _step(masked):
        q = q_sc[...]                         # (H, tq, D), pre-scaled
        k = _head_major(k_ref[...])           # (H, tk, D)
        v = _head_major(v_ref[...])           # (H, tk, D)

        # s[h, q, t] = sum_d q[h, q, d] * k[h, t, d]   (batch = H, leading)
        s = jax.lax.dot_general(
            q, k, (((2,), (2,)), ((0,), (0,))),
            preferred_element_type=jnp.float32)          # (H, tq, tk)

        if masked:
            # Only the diagonal block pays for the mask; with ki == qi and
            # tq == tk the global offsets cancel, so in-block indices suffice.
            row = jax.lax.broadcasted_iota(jnp.int32, (tq, tk), 0)
            col = jax.lax.broadcasted_iota(jnp.int32, (tq, tk), 1)
            s = jnp.where((row >= col)[None], s, _MASK)

        m_prev = m_sc[...]                                # (H, tq, 1)
        m_new = jnp.maximum(m_prev, jnp.max(s, axis=-1, keepdims=True))
        alpha = jnp.exp(m_prev - m_new)
        p = jnp.exp((s - m_new).astype(p_dtype))          # (H, tq, tk)

        l_sc[...] = alpha * l_sc[...] + jnp.sum(
            p.astype(jnp.float32), axis=-1, keepdims=True)
        # acc[h, q, d] += sum_t p[h, q, t] * v[h, t, d]
        acc_sc[...] = alpha * acc_sc[...] + jax.lax.dot_general(
            p.astype(v.dtype), v, (((2,), (1,)), ((0,), (0,))),
            preferred_element_type=jnp.float32)           # (H, tq, D)
        m_sc[...] = m_new

    @pl.when(ki < qi)        # fully-visible kv block: no mask work at all
    def _off_diag():
        _step(masked=False)

    @pl.when(ki == qi)       # diagonal block: masked compute, then finalize
    def _diag():
        _step(masked=True)
        # Exact reciprocal keeps f32 parity with the reference; switch to
        # approx=True (EUP vrcp) for bf16 production outputs.
        inv_l = pl.reciprocal(l_sc[...], approx=False)
        # One head<->seq relayout per q tile: output is stored (tq, H, D) so
        # the wrapper's merge-heads is a free reshape (no HBM transpose).
        o_ref[...] = _seq_major((acc_sc[...] * inv_l).astype(o_ref.dtype))


def flash_attention(qkv):
    """qkv: (B, T, 3, H, D) view of the c_attn output.  Returns (B, T, H, D)."""
    B, T, three, H, D = qkv.shape
    assert three == 3
    # TODO(synk): raise tq to 512 on v5e (lowest HBM BW) and chunk heads on a
    # grid axis for v7x (64 MiB VMEM) at large H; also optionally drop the
    # upper-triangle grid steps via a scalar-prefetched (qi, ki) table.
    tq = _pick_tile(T, (256, 128))
    tk = tq
    assert tq == tk, "finalize-on-diagonal requires equal q/kv tiles"
    nq, nk = T // tq, T // tk

    q_map = lambda b, qi, ki: (b, qi, 0, 0, 0)
    # Clamp so kv tiles above the causal diagonal never trigger a fresh DMA.
    k_map = lambda b, qi, ki: (b, jnp.minimum(ki, qi), 1, 0, 0)
    v_map = lambda b, qi, ki: (b, jnp.minimum(ki, qi), 2, 0, 0)
    o_map = lambda b, qi, ki: (b, qi, 0, 0)

    # Last two block dims equal the full array dims (H, D) -> (8,128) rule ok.
    q_block = (None, tq, None, H, D)
    kv_block = (None, tk, None, H, D)

    return pl.pallas_call(
        _flash_attn_kernel,
        out_shape=jax.ShapeDtypeStruct((B, T, H, D), qkv.dtype),
        grid_spec=pltpu.PrefetchScalarGridSpec(
            num_scalar_prefetch=0,
            grid=(B, nq, nk),
            in_specs=[
                pl.BlockSpec(q_block, q_map),
                pl.BlockSpec(kv_block, k_map),
                pl.BlockSpec(kv_block, v_map),
            ],
            out_specs=pl.BlockSpec((None, tq, H, D), o_map),
            scratch_shapes=[
                pltpu.VMEM((H, tq, D), qkv.dtype),     # head-major, pre-scaled q
                # TODO(synk): m/l are lane-padded to 128; pack lane-dense if tq
                # is pushed to 512 or heads are chunked on v7x.
                pltpu.VMEM((H, tq, 1), jnp.float32),   # running max m
                pltpu.VMEM((H, tq, 1), jnp.float32),   # running sum l
                pltpu.VMEM((H, tq, D), jnp.float32),   # unnormalized output acc
            ],
        ),
        compiler_params=pltpu.CompilerParams(
            dimension_semantics=("parallel", "parallel", "arbitrary"),
            vmem_limit_bytes=_VMEM_LIMIT_BYTES),
        cost_estimate=pl.CostEstimate(
            flops=2 * B * H * T * T * D,               # causal ~half of 4*B*H*T^2*D
            transcendentals=B * H * T * T // 2,
            bytes_accessed=qkv.dtype.itemsize * 4 * B * T * H * D),
    )(qkv, qkv, qkv)


# ----------------------------------------------------------------------------
# Module forward (glue is free reshapes; all heavy work in the two kernels).
# NOTE: feed bf16 activations/weights in real workloads (f32 accumulation is
# already handled via preferred_element_type inside the kernels).
# ----------------------------------------------------------------------------
def causal_self_attention(x, params, n_head):
    B, T, C = x.shape
    assert C % n_head == 0
    D = C // n_head

    # c_attn: (B*T, C) -> (B*T, 3C)
    qkv = linear(x.reshape(B * T, C), params["w_attn"], params["b_attn"])

    # Free view: (B, T, 3, H, D).  No head-split transpose -- the attention
    # kernel's BlockSpecs index q/k/v straight out of this array.
    qkv = qkv.reshape(B, T, 3, n_head, D)

    y = flash_attention(qkv)                 # (B, T, H, D)
    y = y.reshape(B * T, C)                  # merge heads: free reshape

    # c_proj: (B*T, C) -> (B, T, C)
    out = linear(y, params["w_proj"], params["b_proj"])
    return out.reshape(B, T, C)


# Pure-JAX reference for validation.
def reference(x, params, n_head):
    B, T, C = x.shape
    D = C // n_head
    qkv = x @ params["w_attn"] + params["b_attn"]
    q, k, v = jnp.split(qkv, 3, axis=-1)
    q = q.reshape(B, T, n_head, D).transpose(0, 2, 1, 3)
    k = k.reshape(B, T, n_head, D).transpose(0, 2, 1, 3)
    v = v.reshape(B, T, n_head, D).transpose(0, 2, 1, 3)
    s = jnp.einsum("bhqd,bhkd->bhqk", q, k) / math.sqrt(D)
    mask = jnp.tril(jnp.ones((T, T), dtype=bool))
    s = jnp.where(mask, s, -jnp.inf)
    p = jax.nn.softmax(s, axis=-1)
    y = jnp.einsum("bhqk,bhkd->bhqd", p, v)
    y = y.transpose(0, 2, 1, 3).reshape(B, T, C)
    return y @ params["w_proj"] + params["b_proj"]


if __name__ == "__main__":
    B, T, n_head, d_model = 2, 8, 4, 32  # D = 8

    key = jax.random.PRNGKey(0)
    k1, k2, k3, k4, kx = jax.random.split(key, 5)
    params = {
        "w_attn": 0.02 * jax.random.normal(k1, (d_model, 3 * d_model), jnp.float32),
        "b_attn": 0.02 * jax.random.normal(k2, (3 * d_model,), jnp.float32),
        "w_proj": 0.02 * jax.random.normal(k3, (d_model, d_model), jnp.float32),
        "b_proj": 0.02 * jax.random.normal(k4, (d_model,), jnp.float32),
    }
    x = jax.random.normal(kx, (B, T, d_model), jnp.float32)

    y = causal_self_attention(x, params, n_head)
    y = jax.block_until_ready(y)

    y_ref = reference(x, params, n_head)
    assert y.shape == (B, T, d_model)
    assert jnp.allclose(y, y_ref, atol=1e-3, rtol=1e-3), "mismatch vs reference"

    print("KERNEL_OK")
</pallas_src>

<mosaic_0001>
module attributes {stable_mosaic.version = 11 : i64} {
  func.func @_linear_kernel(%arg0: i32, %arg1: i32, %arg2: i32, %arg3: memref<16x32xf32, #tpu.memory_space<vmem>>, %arg4: memref<32x96xf32, #tpu.memory_space<vmem>>, %arg5: memref<1x96xf32, #tpu.memory_space<vmem>>, %arg6: memref<16x96xf32, #tpu.memory_space<vmem>>, %arg7: memref<16x96xf32, #tpu.memory_space<vmem>>) attributes {dimension_semantics = [#tpu.dimension_semantics<parallel>, #tpu.dimension_semantics<parallel>, #tpu.dimension_semantics<arbitrary>], iteration_bounds = array<i64: 1, 1, 1>, scalar_prefetch = 0 : i64, scratch_operands = 1 : i64, tpu.core_type = #tpu.core_type<tc>, window_params = [{transform_indices = @transform_0, window_bounds = array<i64: 16, 32>}, {transform_indices = @transform_1, window_bounds = array<i64: 32, 96>}, {transform_indices = @transform_2, window_bounds = array<i64: 1, 96>}, {transform_indices = @transform_3, window_bounds = array<i64: 16, 96>}]} {
    %c0_i32 = arith.constant 0 : i32
    %0 = arith.cmpi eq, %arg2, %c0_i32 : i32
    %1 = arith.extui %0 : i1 to i32
    %c0_i32_0 = arith.constant 0 : i32
    %2 = arith.cmpi ne, %1, %c0_i32_0 : i32
    scf.if %2 {
      %cst_10 = arith.constant 0.000000e+00 : f32
      %12 = vector.broadcast %cst_10 : f32 to vector<16x96xf32>
      %c0_11 = arith.constant 0 : index
      %c0_12 = arith.constant 0 : index
      %13 = vector.load %arg7[%c0_11, %c0_12] : memref<16x96xf32, #tpu.memory_space<vmem>>, vector<16x96xf32>
      tpu.vector_store %arg7[%c0_11, %c0_12], %12 {strides = array<i32>} : memref<16x96xf32, #tpu.memory_space<vmem>>, vector<16x96xf32>,
    } else {
    }
    %c0 = arith.constant 0 : index
    %c0_1 = arith.constant 0 : index
    %3 = vector.load %arg7[%c0, %c0_1] : memref<16x96xf32, #tpu.memory_space<vmem>>, vector<16x96xf32>
    %c0_2 = arith.constant 0 : index
    %c0_3 = arith.constant 0 : index
    %4 = vector.load %arg3[%c0_2, %c0_3] : memref<16x32xf32, #tpu.memory_space<vmem>>, vector<16x32xf32>
    %c0_4 = arith.constant 0 : index
    %c0_5 = arith.constant 0 : index
    %5 = vector.load %arg4[%c0_4, %c0_5] : memref<32x96xf32, #tpu.memory_space<vmem>>, vector<32x96xf32>
    %cst = arith.constant dense<0.000000e+00> : vector<16x96xf32>
    %6 = tpu.matmul %4, %5, %cst {dimension_numbers = #tpu.dot_dimension_numbers<[1], [0], [0], [1], [0, 0, 1, 1], [], []>} : vector<16x32xf32>, vector<32x96xf32>, vector<16x96xf32> -> vector<16x96xf32>
    %7 = arith.addf %3, %6 : vector<16x96xf32>
    %c0_6 = arith.constant 0 : index
    %c0_7 = arith.constant 0 : index
    %8 = vector.load %arg7[%c0_6, %c0_7] : memref<16x96xf32, #tpu.memory_space<vmem>>, vector<16x96xf32>
    tpu.vector_store %arg7[%c0_6, %c0_7], %7 {strides = array<i32>} : memref<16x96xf32, #tpu.memory_space<vmem>>, vector<16x96xf32>,
    %c0_i32_8 = arith.constant 0 : i32
    %9 = arith.cmpi eq, %arg2, %c0_i32_8 : i32
    %10 = arith.extui %9 : i1 to i32
    %c0_i32_9 = arith.constant 0 : i32
    %11 = arith.cmpi ne, %10, %c0_i32_9 : i32
    scf.if %11 {
      %c0_10 = arith.constant 0 : index
      %c0_11 = arith.constant 0 : index
      %12 = vector.load %arg7[%c0_10, %c0_11] : memref<16x96xf32, #tpu.memory_space<vmem>>, vector<16x96xf32>
      %c0_12 = arith.constant 0 : index
      %c0_13 = arith.constant 0 : index
      %13 = vector.load %arg5[%c0_12, %c0_13] : memref<1x96xf32, #tpu.memory_space<vmem>>, vector<1x96xf32>
      %14 = vector.broadcast %13 : vector<1x96xf32> to vector<16x96xf32>
      %15 = arith.addf %12, %14 : vector<16x96xf32>
      %c0_14 = arith.constant 0 : index
      %c0_15 = arith.constant 0 : index
      %16 = vector.load %arg6[%c0_14, %c0_15] : memref<16x96xf32, #tpu.memory_space<vmem>>, vector<16x96xf32>
      tpu.vector_store %arg6[%c0_14, %c0_15], %15 {strides = array<i32>} : memref<16x96xf32, #tpu.memory_space<vmem>>, vector<16x96xf32>,
    } else {
    }
    return
  }
  func.func @transform_0(%arg0: i32, %arg1: i32, %arg2: i32) -> (i32, i32) {
    %c0_i32 = arith.constant 0 : i32
    return %arg0, %arg2 : i32, i32
  }
  func.func @transform_1(%arg0: i32, %arg1: i32, %arg2: i32) -> (i32, i32) {
    %c0_i32 = arith.constant 0 : i32
    return %arg2, %arg1 : i32, i32
  }
  func.func @transform_2(%arg0: i32, %arg1: i32, %arg2: i32) -> (i32, i32) {
    %c0_i32 = arith.constant 0 : i32
    %c0_i32_0 = arith.constant 0 : i32
    return %c0_i32, %arg1 : i32, i32
  }
  func.func @transform_3(%arg0: i32, %arg1: i32, %arg2: i32) -> (i32, i32) {
    %c0_i32 = arith.constant 0 : i32
    return %arg0, %arg1 : i32, i32
  }
}

</mosaic_0001>

<llo_original>
// kernel: tpu_custom_call.1
$region0: #{tpu_custom_call.1}
  #allocation0 [shape = 'u32[]', space=smem, size = 0x4, offset = 0x4, fixed_abs, tag = 'smem constant byte address 0x4 - core index']
  #allocation1 [shape = 'u32[144,128]{1,0:T(1,128)}', space=vmem, size = 0x12000, scoped, tag = 'internal scratch']
  #allocation2 [shape = 'f32[16,96]{1,0:T(8,128)}', space=vmem, size = 0x2000, scoped, tag = 'scratch operand']
  %s0 = inlined_call_operand.hbm [shape: f32[16,32], index: 0, kind: input, shape index: {}]
  %s1 = inlined_call_operand.hbm [shape: f32[32,96], index: 1, kind: input, shape index: {}]
  %s2 = inlined_call_operand.vmem [shape: f32[1,96], index: 2, kind: input, shape index: {}]
  %s3 = inlined_call_operand.hbm [shape: f32[16,96], index: 3, kind: output, shape index: {}]
  %s4 = sld [smem:[#allocation0]]
  $region38: #{tpu_custom_call.1} parent=0
    _
  %s6 = ssub.s32 1, %s4
  %s7 = scalar_select 0, %s6, %s4
  $region1: #{tpu_custom_call.1} parent=0
    #allocation3 [shape = 'u8[8192]{0}', space=vmem, size = 0x2000, scoped, tag = 'input window, operand 0, single buffered']
    #allocation4 [shape = 's32[1]{0}', space=sflag, size = 0x4, scoped, tag = 'scoped memory for tpu_custom_call.1']
    #allocation5 [shape = 's32[1]{0}', space=sflag, size = 0x4, scoped, tag = 'scoped memory for tpu_custom_call.1']
    #allocation6 [shape = 'u8[16384]{0}', space=vmem, size = 0x4000, scoped, tag = 'input window, operand 1, single buffered']
    #allocation7 [shape = 's32[1]{0}', space=sflag, size = 0x4, scoped, tag = 'scoped memory for tpu_custom_call.1']
    #allocation8 [shape = 'u8[8192]{0}', space=vmem, size = 0x2000, scoped, tag = 'output window, operand 0, single buffered']
    %8 = vsyncpa [#allocation4], 0
    %9 = vsyncpa [#allocation7], 0
    %10 = vsyncpa [#allocation5], 0
    // Predicated region
    $region2: #{tpu_custom_call.1} parent=1 // pred_check
      _
    $region3: #{tpu_custom_call.1} parent=1 // pred_check_branch
      %12 = sbr.rel (0) target = $region5
    $region4: #{tpu_custom_call.1} parent=1 // pred_region
      %s14 = ssub.s32 256, 256
      %15 = vsyncadd [#allocation4], %s14
      %s16 = sshll.u32 [#allocation3], 4
      %s17 = int_to_ptr.vmem [resolvable:$true] %s16
      %22 = dma.hbm_to_vmem [thread:$0]  %s0, 256, %s17, [#allocation4], 128, 128, 8
    $region5: #{tpu_custom_call.1} parent=1 // pred_fallthru
      _
    // Predicated region
    $region6: #{tpu_custom_call.1} parent=1 // pred_check
      _
    $region7: #{tpu_custom_call.1} parent=1 // pred_check_branch
      %24 = sbr.rel (0) target = $region9
    $region8: #{tpu_custom_call.1} parent=1 // pred_region
      %s26 = ssub.s32 512, 512
      %27 = vsyncadd [#allocation7], %s26
      %s28 = sshll.u32 [#allocation6], 4
      %s29 = int_to_ptr.vmem [resolvable:$true] %s28
      %34 = dma.hbm_to_vmem [thread:$0]  %s1, 512, %s29, [#allocation7], 128, 128, 8
    $region9: #{tpu_custom_call.1} parent=1 // pred_fallthru
      _
    // Predicated region
    $region10: #{tpu_custom_call.1} parent=1 // pred_check
      _
    $region11: #{tpu_custom_call.1} parent=1 // pred_check_branch
      %36 = sbr.rel (0) target = $region13
    $region12: #{tpu_custom_call.1} parent=1 // pred_region
      _
    $region13: #{tpu_custom_call.1} parent=1 // pred_fallthru
      _
    // Predicated region
    $region14: #{tpu_custom_call.1} parent=1 // pred_check
      _
    $region15: #{tpu_custom_call.1} parent=1 // pred_check_branch
      %38 = sbr.rel (0) target = $region17
    $region16: #{tpu_custom_call.1} parent=1 // pred_region
      %39 = dma.done [#allocation4], 256
    $region17: #{tpu_custom_call.1} parent=1 // pred_fallthru
      _
    // Predicated region
    $region18: #{tpu_custom_call.1} parent=1 // pred_check
      _
    $region19: #{tpu_custom_call.1} parent=1 // pred_check_branch
      %41 = sbr.rel (0) target = $region21
    $region20: #{tpu_custom_call.1} parent=1 // pred_region
      %42 = dma.done [#allocation7], 512
    $region21: #{tpu_custom_call.1} parent=1 // pred_fallthru
      _
    %p43 = scmp.eq.s32.totalorder 0, 0
    // Predicated region
    $region22: #{tpu_custom_call.1} parent=1 // pred_check
      %p44 = pneg %p43
    $region23: #{tpu_custom_call.1} parent=1 // pred_check_branch
      %46 = sbr.rel (%p44) target = $region25
    $region24: #{tpu_custom_call.1} parent=1 // pred_region
      %vm47 = vcmask 785408
      %48 = vst.msk [vmem:[#allocation2] sm:$0xff] %vm47, 0.0
      %49 = vst.msk [vmem:[#allocation2 + $0x8] sm:$0xff] %vm47, 0.0
    $region25: #{tpu_custom_call.1} parent=1 // pred_fallthru
      _
    %v50 = vld [vmem:[#allocation2] sm:$0xff]
    %v51 = vld [vmem:[#allocation2 + $0x8] sm:$0xff]
    %v52 = vld [vmem:[#allocation3] sm:$0xff]
    %v53 = vld [vmem:[#allocation3 + $0x8] sm:$0xff]
    %v54 = vld [vmem:[#allocation6] sm:$0xff]
    %v55 = vld [vmem:[#allocation6 + $0x8] sm:$0xff]
    %v56 = vld [vmem:[#allocation6 + $0x10] sm:$0xff]
    %v57 = vld [vmem:[#allocation6 + $0x18] sm:$0xff]
    %vm58 = vcmask 261120
    %v60 = vsel %vm58, %v52, 0
    %v63 = vsel %vm58, %v53, 0
    %65 = vmatprep.subr.mxu0 0.0
    %66 = vmatpush1.msra.mxu0 %v54
    %67 = vmatprep.subr.mxu0 0.0
    %68 = vmatpush1.msra.mxu0 %v55
    %69 = vmatprep.subr.mxu0 0.0
    %70 = vmatpush1.msra.mxu0 %v56
    %71 = vmatprep.subr.mxu0 0.0
    %72 = vmatpush1.msra.mxu0 %v57
    %73 = vmatprep.subr.mxu0 0.0
    %74 = vmatpush1.msra.mxu0 0.0
    %75 = vmatprep.subr.mxu0 0.0
    %76 = vmatpush1.msra.mxu0 0.0
    %77 = vmatprep.subr.mxu0 0.0
    %78 = vmatpush1.msra.mxu0 0.0
    %79 = vmatprep.subr.mxu0 0.0
    %80 = vmatpush1.msra.mxu0 0.0
    %81 = vmatprep.subr.mxu0 0.0
    %82 = vmatpush1.msra.mxu0 0.0
    %83 = vmatprep.subr.mxu0 0.0
    %84 = vmatpush1.msra.mxu0 0.0
    %85 = vmatprep.subr.mxu0 0.0
    %86 = vmatpush1.msra.mxu0 0.0
    %87 = vmatprep.subr.mxu0 0.0
    %88 = vmatpush1.msra.mxu0 0.0
    %89 = vmatprep.subr.mxu0 0.0
    %90 = vmatpush1.msra.mxu0 0.0
    %91 = vmatprep.subr.mxu0 0.0
    %92 = vmatpush1.msra.mxu0 0.0
    %93 = vmatprep.subr.mxu0 0.0
    %94 = vmatpush1.msra.mxu0 0.0
    %95 = vmatprep.subr.mxu0 0.0
    %96 = vmatpush1.msra.mxu0 0.0
    %97 = vmatprep.subr.mxu0 0.0
    %98 = vmatpush1.msra.mxu0 0.0
    %99 = vmatprep.subr.mxu0 0.0
    %100 = vmatpush1.msra.mxu0 0.0
    %101 = vmatprep.subr.mxu0 0.0
    %102 = vmatpush1.msra.mxu0 0.0
    %103 = vmatprep.subr.mxu0 0.0
    %104 = vmatpush1.msra.mxu0 0.0
    %105 = vmatprep.subr.mxu0 0.0
    %106 = vmatpush1.msra.mxu0 0.0
    %107 = vmatprep.subr.mxu0 0.0
    %108 = vmatpush1.msra.mxu0 0.0
    %109 = vmatprep.subr.mxu0 0.0
    %110 = vmatpush1.msra.mxu0 0.0
    %111 = vmatprep.subr.mxu0 0.0
    %112 = vmatpush1.msra.mxu0 0.0
    %113 = vmatprep.subr.mxu0 0.0
    %114 = vmatpush1.msra.mxu0 0.0
    %115 = vmatprep.subr.mxu0 0.0
    %116 = vmatpush1.msra.mxu0 0.0
    %117 = vmatprep.subr.mxu0 0.0
    %118 = vmatpush1.msra.mxu0 0.0
    %119 = vmatprep.subr.mxu0 0.0
    %120 = vmatpush1.msra.mxu0 0.0
    %121 = vmatprep.subr.mxu0 0.0
    %122 = vmatpush1.msra.mxu0 0.0
    %123 = vmatprep.subr.mxu0 0.0
    %124 = vmatpush1.msra.mxu0 0.0
    %125 = vmatprep.subr.mxu0 0.0
    %126 = vmatpush1.msra.mxu0 0.0
    %127 = vmatprep.subr.mxu0 0.0
    %128 = vmatpush1.msra.mxu0 0.0
    %129 = vmatprep.mubr.f32.mxu0 0.0
    %130 = vmatmul.mubr.f32.gmra.mrb[0].mxu0 %v60
    %v131 = vpop.f32.mrb[0].mxu0
    %v132 = vadd.f32 0.0, %v131
    %v133 = vpop.f32.mrb[0].mxu0
    %134 = vmatprep.mubr.f32.mxu0 0.0
    %135 = vmatmul.mubr.f32.gmra.mrb[0].mxu0 %v63
    %v136 = vpop.f32.mrb[0].mxu0
    %v137 = vadd.f32 0.0, %v136
    %v138 = vpop.f32.mrb[0].mxu0
    %139 = vdwg.mxu0
    %v140 = vadd.f32 %v50, %v132
    %v141 = vadd.f32 %v51, %v137
    %vm142 = vcmask 785408
    %143 = vst.msk [vmem:[#allocation2] sm:$0xff] %vm142, %v140
    %144 = vst.msk [vmem:[#allocation2 + $0x8] sm:$0xff] %vm142, %v141
    // Predicated region
    $region26: #{tpu_custom_call.1} parent=1 // pred_check
      %p145 = pneg %p43
    $region27: #{tpu_custom_call.1} parent=1 // pred_check_branch
      %147 = sbr.rel (%p145) target = $region29
    $region28: #{tpu_custom_call.1} parent=1 // pred_region
      %v148 = vld [vmem:[#allocation2] sm:$0xff]
      %v149 = vld [vmem:[#allocation2 + $0x8] sm:$0xff]
      %v150 = vld [vmem:[%s2] sm:$0x1]
      %v152 = vlaneseq
      %v153 = vshrl.u32 %v152, 7
      %v154 = vsub.s32 0, %v153
      %v155 = vrot.slane %v150, %v154
      %v157 = vadd.f32 %v148, %v155
      %v158 = vadd.f32 %v149, %v155
      %159 = vst.msk [vmem:[#allocation8] sm:$0xff] %vm142, %v157
      %160 = vst.msk [vmem:[#allocation8 + $0x8] sm:$0xff] %vm142, %v158
    $region29: #{tpu_custom_call.1} parent=1 // pred_fallthru
      _
    // Predicated region
    $region30: #{tpu_custom_call.1} parent=1 // pred_check
      _
    $region31: #{tpu_custom_call.1} parent=1 // pred_check_branch
      %162 = sbr.rel (0) target = $region33
    $region32: #{tpu_custom_call.1} parent=1 // pred_region
      %s164 = ssub.s32 256, 256
      %165 = vsyncadd [#allocation5], %s164
      %s166 = sshll.u32 [#allocation8], 4
      %s167 = int_to_ptr.vmem [resolvable:$true] %s166
      %172 = dma.vmem_to_hbm [thread:$0]  %s167, 256, %s3, [#allocation5], 128, 128, 8
    $region33: #{tpu_custom_call.1} parent=1 // pred_fallthru
      _
    // Predicated region
    $region34: #{tpu_custom_call.1} parent=1 // pred_check
      _
    $region35: #{tpu_custom_call.1} parent=1 // pred_check_branch
      %174 = sbr.rel (0) target = $region37
    $region36: #{tpu_custom_call.1} parent=1 // pred_region
      %175 = dma.done [#allocation5], 256
    $region37: #{tpu_custom_call.1} parent=1 // pred_fallthru
      _
    %176 = vsyncpa [#allocation4], 1
    %177 = vsyncpa [#allocation7], 1
    %178 = vsyncpa [#allocation5], 1

</llo_original>
